<compile_context>
chip_gen: v7x
topology: tpu7x:2x2x1
jax: 0.10.0
libtpu: 0.0.40
codegen_flags: <defaults>
</compile_context>

<pallas_src>
import functools

import jax
import jax.numpy as jnp
from jax import lax
from jax.experimental import pallas as pl
from jax.experimental.pallas import tpu as pltpu


def _ls_ce_tile_kernel(x_ref, t_ref, out_ref, *, eps: float, n_rows: int,
                       tile_n: int):
    xn = x_ref[...]                                     # (tile_n, C) native dtype
    tn, c = xn.shape
    t = t_ref[...]                                      # (tile_n, 1) int32

    # One-hot gather of x[i, target[i]] in the native dtype (exact: a single
    # nonzero term per row), upcast after.
    col = lax.broadcasted_iota(jnp.int32, (tn, c), 1)
    gathered = jnp.sum(
        jnp.where(col == t, xn, jnp.zeros((), xn.dtype)),
        axis=-1, keepdims=True).astype(jnp.float32)     # (tile_n, 1)

    # Numerically stable log-sum-exp in f32; `shifted` only feeds exp().
    xf = xn.astype(jnp.float32)
    m = jnp.max(xf, axis=-1, keepdims=True)             # (tile_n, 1)
    row_sum = jnp.sum(xf, axis=-1, keepdims=True)       # sum_j x_ij
    sum_exp = jnp.sum(jnp.exp(xf - m), axis=-1, keepdims=True)
    log_z = m + jnp.log(sum_exp)                        # full logsumexp_j x_ij

    smooth = jnp.float32(c) * log_z - row_sum           # = -sum_j log_preds[i, j]
    nll = log_z - gathered                              # = -log_preds[i, target_i]
    row_loss = (eps / c) * smooth + (1.0 - eps) * nll   # (tile_n, 1)

    # Mask the ragged tail (last tile reads out-of-bounds garbage rows) before
    # reducing this tile to a single partial sum.
    row0 = pl.program_id(0) * tile_n
    rid = lax.broadcasted_iota(jnp.int32, (tn, 1), 0) + row0
    row_loss = jnp.where(rid < n_rows, row_loss, 0.0)

    out_ref[...] = jnp.sum(row_loss, axis=0, keepdims=True).reshape(1, 1, 1)


def _tpu_vmem_capacity_bytes() -> int:
    try:
        return int(pltpu.get_tpu_info().vmem_capacity_bytes)
    except Exception:
        return 64 * 1024 * 1024          # conservative (v7x-sized) fallback


def label_smoothing_cross_entropy(output, target, eps: float = 0.1,
                                  tile_n: int | None = None):
    """Pallas equivalent of LabelSmoothingCrossEntropy(eps, reduction='mean')."""
    n, c = output.shape
    itemsize = jnp.dtype(output.dtype).itemsize

    # Sublane pack for the input dtype: 8 (f32), 16 (bf16), 32 (int8/fp8).
    pack = 8 * max(1, 4 // itemsize)
    n_rounded = pl.cdiv(n, pack) * pack

    vmem_cap = _tpu_vmem_capacity_bytes()
    big_vmem = vmem_cap >= 100 * 1024 * 1024     # v5e/v6e (128 MiB) vs v7x (64 MiB)

    auto = tile_n is None
    if auto:
        # Size so that one full-tile f32 temporary is ~8 MiB (v5e/v6e) / ~4 MiB
        # (v7x); cap at 2048 rows, round to the sublane pack.
        f32_budget = (8 if big_vmem else 4) * 1024 * 1024
        tile_n = max(pack, min(2048, (f32_budget // max(1, 4 * c)) // pack * pack))
    else:
        tile_n = max(pack, (int(tile_n) // pack) * pack)
    tile_n = min(tile_n, n_rounded)
    # Keep the batch grid >= 2 (roughly even halves) when possible so both v7x
    # TensorCores get work under dimension_semantics=("parallel",).
    if auto and tile_n >= n_rounded and n_rounded >= 2 * pack:
        tile_n = max(pack, pl.cdiv(pl.cdiv(n, 2), pack) * pack)

    num_tiles = pl.cdiv(n, tile_n)

    # Generation-aware VMEM limit: double-buffered input block + a few full-tile
    # f32 temporaries, capped well under physical VMEM (64 MiB on v7x).
    block_bytes = tile_n * c * itemsize
    f32_tile_bytes = tile_n * c * 4
    footprint = 2 * block_bytes + 4 * f32_tile_bytes + 4 * tile_n * 4 + (64 << 10)
    cap = (96 if big_vmem else 40) * 1024 * 1024
    vmem_limit = int(min(cap, max(16 * 1024 * 1024, int(footprint * 1.25))))

    t = target.astype(jnp.int32).reshape(n, 1)           # tiny; no padding needed

    partial_sums = pl.pallas_call(
        functools.partial(_ls_ce_tile_kernel, eps=float(eps), n_rows=n,
                          tile_n=tile_n),
        out_shape=jax.ShapeDtypeStruct((num_tiles, 1, 1), jnp.float32),
        grid=(num_tiles,),
        in_specs=[
            pl.BlockSpec((tile_n, c), lambda i: (i, 0)),
            pl.BlockSpec((tile_n, 1), lambda i: (i, 0)),
        ],
        out_specs=pl.BlockSpec((1, 1, 1), lambda i: (i, 0, 0)),
        compiler_params=pltpu.CompilerParams(
            dimension_semantics=("parallel",),
            vmem_limit_bytes=vmem_limit,
        ),
        cost_estimate=pl.CostEstimate(
            flops=6 * n * c,
            transcendentals=n * c + n,
            bytes_accessed=n * c * itemsize + n * 4 + num_tiles * 4,
        ),
    )(output, t)

    # reduction='mean' over the original (unpadded) rows.
    return jnp.sum(partial_sums) / jnp.float32(n)


def _reference(output, target, eps: float = 0.1):
    """Plain-JAX reference mirroring the PyTorch forward (reduction='mean')."""
    c = output.shape[-1]
    log_preds = jax.nn.log_softmax(output.astype(jnp.float32), axis=-1)
    smooth = jnp.mean(-jnp.sum(log_preds, axis=-1))
    nll = jnp.mean(-jnp.take_along_axis(log_preds, target[:, None], axis=-1)[:, 0])
    return smooth * eps / c + (1.0 - eps) * nll


if __name__ == "__main__":
    key = jax.random.PRNGKey(0)
    k_x, k_t = jax.random.split(key)

    # 1) Small f32 case: batch of 8 examples, 32 classes (one aligned tile).
    N, C = 8, 32
    logits = jax.random.normal(k_x, (N, C), dtype=jnp.float32)
    labels = jax.random.randint(k_t, (N,), 0, C, dtype=jnp.int32)
    loss = jax.block_until_ready(label_smoothing_cross_entropy(logits, labels, eps=0.1))
    ref = _reference(logits, labels, eps=0.1)
    assert jnp.allclose(loss, ref, rtol=1e-4, atol=1e-5), (loss, ref)

    # 2) bf16 logits + ragged batch (13 rows in one 16-row tile, masked tail).
    N2, C2 = 13, 160
    logits2 = jax.random.normal(k_x, (N2, C2), dtype=jnp.bfloat16)
    labels2 = jax.random.randint(k_t, (N2,), 0, C2, dtype=jnp.int32)
    loss2 = jax.block_until_ready(label_smoothing_cross_entropy(logits2, labels2, eps=0.1))
    ref2 = _reference(logits2, labels2, eps=0.1)
    assert jnp.allclose(loss2, ref2, rtol=2e-3, atol=2e-3), (loss2, ref2)

    # 3) f32, multi-tile ragged grid (3 tiles of 8 rows over 20 rows) exercising
    #    the in-kernel tail-row mask and the per-tile partial-sum epilogue.
    N3, C3 = 20, 128
    logits3 = jax.random.normal(k_x, (N3, C3), dtype=jnp.float32)
    labels3 = jax.random.randint(k_t, (N3,), 0, C3, dtype=jnp.int32)
    loss3 = jax.block_until_ready(
        label_smoothing_cross_entropy(logits3, labels3, eps=0.1, tile_n=8))
    ref3 = _reference(logits3, labels3, eps=0.1)
    assert jnp.allclose(loss3, ref3, rtol=1e-4, atol=1e-5), (loss3, ref3)

    print("KERNEL_OK")
</pallas_src>

<mosaic_0001>
module attributes {stable_mosaic.version = 11 : i64} {
  func.func @_ls_ce_tile_kernel(%arg0: i32, %arg1: memref<8x32xf32, #tpu.memory_space<vmem>>, %arg2: memref<8x1xi32, #tpu.memory_space<vmem>>, %arg3: memref<1x1x1xf32, #tpu.memory_space<vmem>>) attributes {dimension_semantics = [#tpu.dimension_semantics<parallel>], iteration_bounds = array<i64: 1>, scalar_prefetch = 0 : i64, scratch_operands = 0 : i64, tpu.core_type = #tpu.core_type<tc>, window_params = [{transform_indices = @transform_0, window_bounds = array<i64: 8, 32>}, {transform_indices = @transform_1, window_bounds = array<i64: 8, 1>}, {transform_indices = @transform_2, window_bounds = array<i64: 1, 1, 1>}]} {
    %c0 = arith.constant 0 : index
    %c0_0 = arith.constant 0 : index
    %0 = vector.load %arg1[%c0, %c0_0] : memref<8x32xf32, #tpu.memory_space<vmem>>, vector<8x32xf32>
    %c0_1 = arith.constant 0 : index
    %c0_2 = arith.constant 0 : index
    %1 = vector.load %arg2[%c0_1, %c0_2] : memref<8x1xi32, #tpu.memory_space<vmem>>, vector<8x1xi32>
    %2 = tpu.iota {dimensions = array<i32: 1>} : vector<8x32xi32>
    %3 = vector.broadcast %1 : vector<8x1xi32> to vector<8x32xi32>
    %4 = arith.cmpi eq, %2, %3 : vector<8x32xi32>
    %cst = arith.constant 0.000000e+00 : f32
    %5 = vector.broadcast %cst : f32 to vector<8x32xf32>
    %6 = arith.select %4, %0, %5 : vector<8x32xi1>, vector<8x32xf32>
    %cst_3 = arith.constant dense<0.000000e+00> : vector<8xf32>
    %7 = vector.multi_reduction <add>, %6, %cst_3 [1] : vector<8x32xf32> to vector<8xf32>
    %8 = vector.shape_cast %7 : vector<8xf32> to vector<8x1xf32>
    %cst_4 = arith.constant dense<0xFF800000> : vector<8xf32>
    %9 = vector.multi_reduction <maximumf>, %0, %cst_4 [1] : vector<8x32xf32> to vector<8xf32>
    %10 = vector.shape_cast %9 : vector<8xf32> to vector<8x1xf32>
    %cst_5 = arith.constant dense<0.000000e+00> : vector<8xf32>
    %11 = vector.multi_reduction <add>, %0, %cst_5 [1] : vector<8x32xf32> to vector<8xf32>
    %12 = vector.shape_cast %11 : vector<8xf32> to vector<8x1xf32>
    %13 = vector.broadcast %10 : vector<8x1xf32> to vector<8x32xf32>
    %14 = arith.subf %0, %13 : vector<8x32xf32>
    %15 = math.exp %14 : vector<8x32xf32>
    %cst_6 = arith.constant dense<0.000000e+00> : vector<8xf32>
    %16 = vector.multi_reduction <add>, %15, %cst_6 [1] : vector<8x32xf32> to vector<8xf32>
    %17 = vector.shape_cast %16 : vector<8xf32> to vector<8x1xf32>
    %18 = math.log %17 : vector<8x1xf32>
    %19 = arith.addf %10, %18 : vector<8x1xf32>
    %cst_7 = arith.constant 3.200000e+01 : f32
    %20 = vector.broadcast %cst_7 : f32 to vector<8x1xf32>
    %21 = arith.mulf %20, %19 : vector<8x1xf32>
    %22 = arith.subf %21, %12 : vector<8x1xf32>
    %23 = arith.subf %19, %8 : vector<8x1xf32>
    %cst_8 = arith.constant 3.125000e-03 : f32
    %24 = vector.broadcast %cst_8 : f32 to vector<8x1xf32>
    %25 = arith.mulf %24, %22 : vector<8x1xf32>
    %cst_9 = arith.constant 0.899999976 : f32
    %26 = vector.broadcast %cst_9 : f32 to vector<8x1xf32>
    %27 = arith.mulf %26, %23 : vector<8x1xf32>
    %28 = arith.addf %25, %27 : vector<8x1xf32>
    %c8_i32 = arith.constant 8 : i32
    %29 = arith.muli %arg0, %c8_i32 : i32
    %30 = tpu.iota {dimensions = array<i32: 0>} : vector<8x1xi32>
    %31 = vector.broadcast %29 : i32 to vector<8x1xi32>
    %32 = arith.addi %30, %31 : vector<8x1xi32>
    %c8_i32_10 = arith.constant 8 : i32
    %33 = vector.broadcast %c8_i32_10 : i32 to vector<8x1xi32>
    %34 = arith.cmpi slt, %32, %33 : vector<8x1xi32>
    %cst_11 = arith.constant 0.000000e+00 : f32
    %35 = vector.broadcast %cst_11 : f32 to vector<8x1xf32>
    %36 = arith.select %34, %28, %35 : vector<8x1xi1>, vector<8x1xf32>
    %cst_12 = arith.constant dense<0.000000e+00> : vector<1xf32>
    %37 = vector.multi_reduction <add>, %36, %cst_12 [0] : vector<8x1xf32> to vector<1xf32>
    %38 = vector.shape_cast %37 : vector<1xf32> to vector<1x1xf32>
    %39 = vector.shape_cast %38 : vector<1x1xf32> to vector<1x1x1xf32>
    %c0_13 = arith.constant 0 : index
    %c0_14 = arith.constant 0 : index
    %c0_15 = arith.constant 0 : index
    %40 = vector.load %arg3[%c0_13, %c0_14, %c0_15] : memref<1x1x1xf32, #tpu.memory_space<vmem>>, vector<1x1x1xf32>
    tpu.vector_store %arg3[%c0_13, %c0_14, %c0_15], %39 {strides = array<i32>} : memref<1x1x1xf32, #tpu.memory_space<vmem>>, vector<1x1x1xf32>,
    return
  }
  func.func @transform_0(%arg0: i32) -> (i32, i32) {
    %c0_i32 = arith.constant 0 : i32
    %c0_i32_0 = arith.constant 0 : i32
    return %arg0, %c0_i32 : i32, i32
  }
  func.func @transform_1(%arg0: i32) -> (i32, i32) {
    %c0_i32 = arith.constant 0 : i32
    %c0_i32_0 = arith.constant 0 : i32
    return %arg0, %c0_i32 : i32, i32
  }
  func.func @transform_2(%arg0: i32) -> (i32, i32, i32) {
    %c0_i32 = arith.constant 0 : i32
    %c0_i32_0 = arith.constant 0 : i32
    %c0_i32_1 = arith.constant 0 : i32
    return %arg0, %c0_i32, %c0_i32_0 : i32, i32, i32
  }
}

</mosaic_0001>

<llo_original>
// kernel: tpu_custom_call.1
$region0: #{tpu_custom_call.1}
  #allocation0 [shape = 'u32[]', space=smem, size = 0x4, offset = 0x4, fixed_abs, tag = 'smem constant byte address 0x4 - core index']
  #allocation1 [shape = 'u32[144,128]{1,0:T(1,128)}', space=vmem, size = 0x12000, scoped, tag = 'internal scratch']
  %s0 = inlined_call_operand.vmem [shape: f32[8,32], index: 0, kind: input, shape index: {}]
  %s1 = inlined_call_operand.vmem [shape: s32[8,1], index: 1, kind: input, shape index: {}]
  %s2 = inlined_call_operand.hbm [shape: f32[1,1,1], index: 2, kind: output, shape index: {}]
  %s3 = sld [smem:[#allocation0]]
  $region18: #{tpu_custom_call.1} parent=0
    _
  %s5 = ssub.s32 1, %s3
  %s6 = scalar_select 0, %s5, %s3
  $region1: #{tpu_custom_call.1} parent=0
    #allocation2 [shape = 'u8[512]{0}', space=vmem, size = 0x400, scoped, tag = 'output window, operand 0, single buffered']
    #allocation3 [shape = 's32[1]{0}', space=sflag, size = 0x4, scoped, tag = 'scoped memory for tpu_custom_call.1']
    %7 = vsyncpa [#allocation3], 0
    // Predicated region
    $region2: #{tpu_custom_call.1} parent=1 // pred_check
      _
    $region3: #{tpu_custom_call.1} parent=1 // pred_check_branch
      %9 = sbr.rel (0) target = $region5
    $region4: #{tpu_custom_call.1} parent=1 // pred_region
      _
    $region5: #{tpu_custom_call.1} parent=1 // pred_fallthru
      _
    // Predicated region
    $region6: #{tpu_custom_call.1} parent=1 // pred_check
      _
    $region7: #{tpu_custom_call.1} parent=1 // pred_check_branch
      %11 = sbr.rel (0) target = $region9
    $region8: #{tpu_custom_call.1} parent=1 // pred_region
      _
    $region9: #{tpu_custom_call.1} parent=1 // pred_fallthru
      _
    %v12 = vld [vmem:[%s0] sm:$0xff]
    %v13 = vld [vmem:[%s1] sm:$0xff]
    %v14 = vlaneseq
    %v15 = vand.u32 %v14, 127
    %16 = vset.pattern.permute.xlu0 0
    %17 = vperm.xlu0 %16, %v13
    %v18 = vpop.permute.xlu0 %17
    %vm19 = vcmp.eq.s32.totalorder %v15, %v18
    %v20 = vsel %vm19, %v12, 0.0
    %vm21 = vcmask 261120
    %v22 = vsel %vm21, %v20, 0.0
    %23 = vadd.xlane.f32.xlu0 %v22
    %v24 = vpop.xlane.xlu0 %23
    %v25 = vsel %vm21, %v12, -inf
    %26 = vmax.xlane.f32.xlu0 %v25
    %v27 = vpop.xlane.xlu0 %26
    %v28 = vsel %vm21, %v12, 0.0
    %29 = vadd.xlane.f32.xlu0 %v28
    %v30 = vpop.xlane.xlu0 %29
    %v31 = vsub.f32 %v12, %v27
    %v32 = vmul.f32 %v31, 1.442695
    %v33 = vpow.pop %v32
    %v34 = vsel %vm21, %v33, 0.0
    %35 = vadd.xlane.f32.xlu0 %v34
    %v36 = vpop.xlane.xlu0 %35
    %v37 = vlog2.pop %v36
    %v38 = vmul.f32 %v37, 0.6931472
    %v39 = vadd.f32 %v27, %v38
    %v40 = vmul.f32 %v39, 32.0
    %v41 = vsub.f32 %v40, %v30
    %v42 = vsub.f32 %v39, %v24
    %v43 = vmul.f32 %v41, 0.003125
    %v44 = vmul.f32 %v42, 0.9
    %v45 = vadd.f32 %v43, %v44
    %s46 = smul.u32 0, 8
    %v47 = vlaneseq
    %v48 = vshrl.u32 %v47, 7
    %v49 = vstv %s46
    %v50 = vadd.s32 %v48, %v49
    %vm51 = vcmp.lt.s32.totalorder %v50, 8
    %v52 = vsel %vm51, %v45, 0.0
    %v53 = vrot.slane %v52, 4
    %v54 = vadd.f32 %v52, %v53
    %v55 = vrot.slane %v54, 2
    %v56 = vadd.f32 %v54, %v55
    %v57 = vrot.slane %v56, 1
    %v58 = vadd.f32 %v56, %v57
    %vm59 = vcmask 0
    %60 = vst.msk [vmem:[#allocation2] sm:$0x1] %vm59, %v58
    // Predicated region
    $region10: #{tpu_custom_call.1} parent=1 // pred_check
      _
    $region11: #{tpu_custom_call.1} parent=1 // pred_check_branch
      %62 = sbr.rel (0) target = $region13
    $region12: #{tpu_custom_call.1} parent=1 // pred_region
      %s64 = ssub.s32 16, 16
      %65 = vsyncadd [#allocation3], %s64
      %s67 = sshll.u32 [#allocation2], 4
      %s68 = int_to_ptr.vmem [resolvable:$true] %s67
      %70 = dma.vmem_to_hbm [thread:$0]  %s68, 16, %s2, [#allocation3]
    $region13: #{tpu_custom_call.1} parent=1 // pred_fallthru
      _
    // Predicated region
    $region14: #{tpu_custom_call.1} parent=1 // pred_check
      _
    $region15: #{tpu_custom_call.1} parent=1 // pred_check_branch
      %72 = sbr.rel (0) target = $region17
    $region16: #{tpu_custom_call.1} parent=1 // pred_region
      %73 = dma.done [#allocation3], 16
    $region17: #{tpu_custom_call.1} parent=1 // pred_fallthru
      _
    %74 = vsyncpa [#allocation3], 1

</llo_original>
